<compile_context>
chip_gen: v7x
topology: tpu7x:2x2x1
jax: 0.10.0
libtpu: 0.0.40
codegen_flags: <defaults>
</compile_context>

<pallas_src>
import jax
import jax.numpy as jnp
from jax import lax
from jax.experimental import pallas as pl
from jax.experimental.pallas import tpu as pltpu


def _round_up(v, m):
    return ((v + m - 1) // m) * m


def _sublane_multiple(dtype):
    size = jnp.dtype(dtype).itemsize
    if size >= 4:
        return 8
    if size == 2:
        return 16
    return 32


def affect_encoder_kernel(x_ref, w_ref, b_ref, o_ref):
    # x_ref: (tb, C)  w_ref: (C, L)  b_ref: (1, L)  o_ref: (tb, L)
    # MXU matmul in native input dtype, f32 accumulate.
    y = jnp.dot(x_ref[...], w_ref[...], preferred_element_type=jnp.float32)
    y = y + b_ref[...].astype(jnp.float32)

    # F.normalize(y, dim=-1):  y / max(||y||, 1e-12) == y * rsqrt(max(||y||^2, 1e-24))
    sq = jnp.sum(y * y, axis=-1, keepdims=True)
    inv = lax.rsqrt(jnp.maximum(sq, 1e-24))      # EUP op, otherwise-idle slot
    o_ref[...] = (y * inv).astype(o_ref.dtype)


def affect_encoder(x, w_t, b, *, tb=None):
    """AffectEncoder forward.

    x:   [B, common_dim]
    w_t: [common_dim, latent_dim]   (nn.Linear weight, transposed)
    b:   [latent_dim]
    """
    B, C = x.shape
    Cw, L = w_t.shape
    assert Cw == C, "weight/input feature mismatch"

    b2 = b.reshape(1, L)

    # Batch tile: whole batch in one grid step whenever it fits under the cap
    # (per-step overhead dominates otherwise); cap at 4096 rows so very large
    # batches still pipeline / shard across v7x TensorCores while staying a
    # few MB under every generation's scoped VMEM default.
    sub = _sublane_multiple(x.dtype)
    if tb is None:
        tb = min(_round_up(B, sub), 4096)
    tb = max(sub, _round_up(tb, sub))
    tb = min(tb, _round_up(B, sub))

    grid = (pl.cdiv(B, tb),)
    out = pl.pallas_call(
        affect_encoder_kernel,
        out_shape=jax.ShapeDtypeStruct((B, L), x.dtype),
        grid_spec=pltpu.PrefetchScalarGridSpec(
            num_scalar_prefetch=0,
            grid=grid,
            in_specs=[
                pl.BlockSpec((tb, C), lambda i: (i, 0)),   # batch-tiled input
                pl.BlockSpec((C, L), lambda i: (0, 0)),    # full weight
                pl.BlockSpec((1, L), lambda i: (0, 0)),    # bias row
            ],
            out_specs=pl.BlockSpec((tb, L), lambda i: (i, 0)),
        ),
        compiler_params=pltpu.CompilerParams(
            dimension_semantics=("parallel",),
        ),
    )(x, w_t, b2)
    return out


def reference(x, w_t, b):
    y = x.astype(jnp.float32) @ w_t.astype(jnp.float32) + b.astype(jnp.float32)
    n = jnp.maximum(jnp.linalg.norm(y, axis=-1, keepdims=True), 1e-12)
    return (y / n).astype(x.dtype)


if __name__ == "__main__":
    # Small shapes consistent with the module: common_dim=32, latent_dim=64.
    common_dim, latent_dim = 32, 64

    key = jax.random.PRNGKey(0)
    kx, kw, kb = jax.random.split(key, 3)

    # Deterministic init mimicking nn.Linear default (uniform in +-1/sqrt(fan_in)).
    bound = 1.0 / (common_dim ** 0.5)
    w = jax.random.uniform(kw, (latent_dim, common_dim), jnp.float32, -bound, bound)
    b = jax.random.uniform(kb, (latent_dim,), jnp.float32, -bound, bound)
    w_t = w.T  # [common_dim, latent_dim]

    # Case 1: toy batch (B=8), f32 — single-tile path.
    x_small = jax.random.normal(kx, (8, common_dim), jnp.float32)
    out = jax.block_until_ready(affect_encoder(x_small, w_t, b))
    ref = reference(x_small, w_t, b)
    assert out.shape == (8, latent_dim)
    assert jnp.allclose(out, ref, atol=1e-5, rtol=1e-5), "f32 small-batch mismatch"

    # Case 2: bigger batch — now a single grid step (no forced split).
    x_big = jax.random.normal(kx, (48, common_dim), jnp.float32)
    out2 = jax.block_until_ready(affect_encoder(x_big, w_t, b))
    ref2 = reference(x_big, w_t, b)
    assert out2.shape == (48, latent_dim)
    assert jnp.allclose(out2, ref2, atol=1e-5, rtol=1e-5), "f32 mismatch"

    # Case 3: batch not a multiple of the sublane tile (partial output block).
    x_odd = jax.random.normal(kx, (10, common_dim), jnp.float32)
    out3 = jax.block_until_ready(affect_encoder(x_odd, w_t, b))
    ref3 = reference(x_odd, w_t, b)
    assert out3.shape == (10, latent_dim)
    assert jnp.allclose(out3, ref3, atol=1e-5, rtol=1e-5), "partial-tile mismatch"

    # Case 4: bf16 inputs flow straight to the MXU (tb rounded to 16).
    xb = x_small.astype(jnp.bfloat16)
    wb = w_t.astype(jnp.bfloat16)
    outb = jax.block_until_ready(affect_encoder(xb, wb, b))
    refb = reference(xb, wb, b)
    assert outb.shape == (8, latent_dim)
    assert jnp.allclose(outb.astype(jnp.float32), refb.astype(jnp.float32),
                        atol=2e-2, rtol=2e-2), "bf16 mismatch"

    # Case 5: batch above the tile cap exercises grid > 1 (megacore path on v7x).
    x_huge = jax.random.normal(kx, (8192, common_dim), jnp.float32)
    out5 = jax.block_until_ready(affect_encoder(x_huge, w_t, b))
    ref5 = reference(x_huge, w_t, b)
    assert out5.shape == (8192, latent_dim)
    assert jnp.allclose(out5, ref5, atol=1e-5, rtol=1e-5), "large-batch mismatch"

    print("KERNEL_OK")
</pallas_src>

<mosaic_0001>
module attributes {stable_mosaic.version = 11 : i64} {
  func.func @affect_encoder_kernel(%arg0: i32, %arg1: memref<8x32xf32, #tpu.memory_space<vmem>>, %arg2: memref<32x64xf32, #tpu.memory_space<vmem>>, %arg3: memref<1x64xf32, #tpu.memory_space<vmem>>, %arg4: memref<8x64xf32, #tpu.memory_space<vmem>>) attributes {dimension_semantics = [#tpu.dimension_semantics<parallel>], iteration_bounds = array<i64: 1>, scalar_prefetch = 0 : i64, scratch_operands = 0 : i64, tpu.core_type = #tpu.core_type<tc>, window_params = [{transform_indices = @transform_0, window_bounds = array<i64: 8, 32>}, {pipeline_mode = #tpu.pipeline_mode<synchronous>, transform_indices = @transform_1, window_bounds = array<i64: 32, 64>}, {pipeline_mode = #tpu.pipeline_mode<synchronous>, transform_indices = @transform_2, window_bounds = array<i64: 1, 64>}, {transform_indices = @transform_3, window_bounds = array<i64: 8, 64>}]} {
    %c0 = arith.constant 0 : index
    %c0_0 = arith.constant 0 : index
    %0 = vector.load %arg1[%c0, %c0_0] : memref<8x32xf32, #tpu.memory_space<vmem>>, vector<8x32xf32>
    %c0_1 = arith.constant 0 : index
    %c0_2 = arith.constant 0 : index
    %1 = vector.load %arg2[%c0_1, %c0_2] : memref<32x64xf32, #tpu.memory_space<vmem>>, vector<32x64xf32>
    %cst = arith.constant dense<0.000000e+00> : vector<8x64xf32>
    %2 = tpu.matmul %0, %1, %cst {dimension_numbers = #tpu.dot_dimension_numbers<[1], [0], [0], [1], [0, 0, 1, 1], [], []>} : vector<8x32xf32>, vector<32x64xf32>, vector<8x64xf32> -> vector<8x64xf32>
    %c0_3 = arith.constant 0 : index
    %c0_4 = arith.constant 0 : index
    %3 = vector.load %arg3[%c0_3, %c0_4] : memref<1x64xf32, #tpu.memory_space<vmem>>, vector<1x64xf32>
    %4 = vector.broadcast %3 : vector<1x64xf32> to vector<8x64xf32>
    %5 = arith.addf %2, %4 : vector<8x64xf32>
    %6 = arith.mulf %5, %5 : vector<8x64xf32>
    %cst_5 = arith.constant dense<0.000000e+00> : vector<8xf32>
    %7 = vector.multi_reduction <add>, %6, %cst_5 [1] : vector<8x64xf32> to vector<8xf32>
    %8 = vector.shape_cast %7 : vector<8xf32> to vector<8x1xf32>
    %cst_6 = arith.constant 1.000000e-24 : f32
    %9 = vector.broadcast %cst_6 : f32 to vector<8x1xf32>
    %10 = arith.maximumf %8, %9 : vector<8x1xf32>
    %11 = math.rsqrt %10 : vector<8x1xf32>
    %12 = vector.broadcast %11 : vector<8x1xf32> to vector<8x64xf32>
    %13 = arith.mulf %5, %12 : vector<8x64xf32>
    %c0_7 = arith.constant 0 : index
    %c0_8 = arith.constant 0 : index
    %14 = vector.load %arg4[%c0_7, %c0_8] : memref<8x64xf32, #tpu.memory_space<vmem>>, vector<8x64xf32>
    tpu.vector_store %arg4[%c0_7, %c0_8], %13 {strides = array<i32>} : memref<8x64xf32, #tpu.memory_space<vmem>>, vector<8x64xf32>,
    return
  }
  func.func @transform_0(%arg0: i32) -> (i32, i32) {
    %c0_i32 = arith.constant 0 : i32
    %c0_i32_0 = arith.constant 0 : i32
    return %arg0, %c0_i32 : i32, i32
  }
  func.func @transform_1(%arg0: i32) -> (i32, i32) {
    %c0_i32 = arith.constant 0 : i32
    %c0_i32_0 = arith.constant 0 : i32
    %c0_i32_1 = arith.constant 0 : i32
    return %c0_i32, %c0_i32_0 : i32, i32
  }
  func.func @transform_2(%arg0: i32) -> (i32, i32) {
    %c0_i32 = arith.constant 0 : i32
    %c0_i32_0 = arith.constant 0 : i32
    %c0_i32_1 = arith.constant 0 : i32
    return %c0_i32, %c0_i32_0 : i32, i32
  }
  func.func @transform_3(%arg0: i32) -> (i32, i32) {
    %c0_i32 = arith.constant 0 : i32
    %c0_i32_0 = arith.constant 0 : i32
    return %arg0, %c0_i32 : i32, i32
  }
}

</mosaic_0001>

<llo_original>
// kernel: tpu_custom_call.1
$region0: #{tpu_custom_call.1}
  #allocation0 [shape = 'u32[]', space=smem, size = 0x4, offset = 0x4, fixed_abs, tag = 'smem constant byte address 0x4 - core index']
  #allocation1 [shape = 'u32[144,128]{1,0:T(1,128)}', space=vmem, size = 0x12000, scoped, tag = 'internal scratch']
  %s0 = inlined_call_operand.hbm [shape: f32[8,32], index: 0, kind: input, shape index: {}]
  %s1 = inlined_call_operand.hbm [shape: f32[32,64], index: 1, kind: input, shape index: {}]
  %s2 = inlined_call_operand.vmem [shape: f32[1,64], index: 2, kind: input, shape index: {}]
  %s3 = inlined_call_operand.hbm [shape: f32[8,64], index: 3, kind: output, shape index: {}]
  %s4 = sld [smem:[#allocation0]]
  $region30: #{tpu_custom_call.1} parent=0
    _
  %s6 = ssub.s32 1, %s4
  %s7 = scalar_select 0, %s6, %s4
  $region1: #{tpu_custom_call.1} parent=0
    #allocation2 [shape = 'u8[4096]{0}', space=vmem, size = 0x1000, scoped, tag = 'input window, operand 0, single buffered']
    #allocation3 [shape = 's32[1]{0}', space=sflag, size = 0x4, scoped, tag = 'scoped memory for tpu_custom_call.1']
    #allocation4 [shape = 's32[1]{0}', space=sflag, size = 0x4, scoped, tag = 'scoped memory for tpu_custom_call.1']
    #allocation5 [shape = 'u8[16384]{0}', space=vmem, size = 0x4000, scoped, tag = 'input window, operand 1, single buffered']
    #allocation6 [shape = 's32[1]{0}', space=sflag, size = 0x4, scoped, tag = 'scoped memory for tpu_custom_call.1']
    #allocation7 [shape = 'u8[4096]{0}', space=vmem, size = 0x1000, scoped, tag = 'output window, operand 0, single buffered']
    %8 = vsyncpa [#allocation3], 0
    %9 = vsyncpa [#allocation6], 0
    %10 = vsyncpa [#allocation4], 0
    // Predicated region
    $region2: #{tpu_custom_call.1} parent=1 // pred_check
      _
    $region3: #{tpu_custom_call.1} parent=1 // pred_check_branch
      %12 = sbr.rel (0) target = $region5
    $region4: #{tpu_custom_call.1} parent=1 // pred_region
      %s14 = ssub.s32 128, 128
      %15 = vsyncadd [#allocation3], %s14
      %s17 = sshll.u32 [#allocation2], 4
      %s18 = int_to_ptr.vmem [resolvable:$true] %s17
      %20 = dma.hbm_to_vmem [thread:$0]  %s0, 128, %s18, [#allocation3]
    $region5: #{tpu_custom_call.1} parent=1 // pred_fallthru
      _
    // Predicated region
    $region6: #{tpu_custom_call.1} parent=1 // pred_check
      _
    $region7: #{tpu_custom_call.1} parent=1 // pred_check_branch
      %22 = sbr.rel (0) target = $region9
    $region8: #{tpu_custom_call.1} parent=1 // pred_region
      %s24 = ssub.s32 512, 512
      %25 = vsyncadd [#allocation6], %s24
      %s26 = sshll.u32 [#allocation5], 4
      %s27 = int_to_ptr.vmem [resolvable:$true] %s26
      %32 = dma.hbm_to_vmem [thread:$0]  %s1, 512, %s27, [#allocation6], 128, 128, 8
    $region9: #{tpu_custom_call.1} parent=1 // pred_fallthru
      _
    // Predicated region
    $region10: #{tpu_custom_call.1} parent=1 // pred_check
      _
    $region11: #{tpu_custom_call.1} parent=1 // pred_check_branch
      %34 = sbr.rel (0) target = $region13
    $region12: #{tpu_custom_call.1} parent=1 // pred_region
      _
    $region13: #{tpu_custom_call.1} parent=1 // pred_fallthru
      _
    // Predicated region
    $region14: #{tpu_custom_call.1} parent=1 // pred_check
      _
    $region15: #{tpu_custom_call.1} parent=1 // pred_check_branch
      %36 = sbr.rel (0) target = $region17
    $region16: #{tpu_custom_call.1} parent=1 // pred_region
      %37 = dma.done [#allocation3], 128
    $region17: #{tpu_custom_call.1} parent=1 // pred_fallthru
      _
    // Predicated region
    $region18: #{tpu_custom_call.1} parent=1 // pred_check
      _
    $region19: #{tpu_custom_call.1} parent=1 // pred_check_branch
      %39 = sbr.rel (0) target = $region21
    $region20: #{tpu_custom_call.1} parent=1 // pred_region
      %40 = dma.done [#allocation6], 512
    $region21: #{tpu_custom_call.1} parent=1 // pred_fallthru
      _
    %v41 = vld [vmem:[#allocation2] sm:$0xff]
    %v42 = vld [vmem:[#allocation5] sm:$0xff]
    %v43 = vld [vmem:[#allocation5 + $0x8] sm:$0xff]
    %v44 = vld [vmem:[#allocation5 + $0x10] sm:$0xff]
    %v45 = vld [vmem:[#allocation5 + $0x18] sm:$0xff]
    %v46 = vld [vmem:[%s2] sm:$0x1]
    %v48 = vlaneseq
    %v49 = vshrl.u32 %v48, 7
    %v50 = vsub.s32 0, %v49
    %v51 = vrot.slane %v46, %v50
    %vm53 = vcmask 261120
    %v55 = vsel %vm53, %v41, 0
    %57 = vmatprep.subr.mxu0 0.0
    %58 = vmatpush1.msra.mxu0 %v42
    %59 = vmatprep.subr.mxu0 0.0
    %60 = vmatpush1.msra.mxu0 %v43
    %61 = vmatprep.subr.mxu0 0.0
    %62 = vmatpush1.msra.mxu0 %v44
    %63 = vmatprep.subr.mxu0 0.0
    %64 = vmatpush1.msra.mxu0 %v45
    %65 = vmatprep.subr.mxu0 0.0
    %66 = vmatpush1.msra.mxu0 0.0
    %67 = vmatprep.subr.mxu0 0.0
    %68 = vmatpush1.msra.mxu0 0.0
    %69 = vmatprep.subr.mxu0 0.0
    %70 = vmatpush1.msra.mxu0 0.0
    %71 = vmatprep.subr.mxu0 0.0
    %72 = vmatpush1.msra.mxu0 0.0
    %73 = vmatprep.subr.mxu0 0.0
    %74 = vmatpush1.msra.mxu0 0.0
    %75 = vmatprep.subr.mxu0 0.0
    %76 = vmatpush1.msra.mxu0 0.0
    %77 = vmatprep.subr.mxu0 0.0
    %78 = vmatpush1.msra.mxu0 0.0
    %79 = vmatprep.subr.mxu0 0.0
    %80 = vmatpush1.msra.mxu0 0.0
    %81 = vmatprep.subr.mxu0 0.0
    %82 = vmatpush1.msra.mxu0 0.0
    %83 = vmatprep.subr.mxu0 0.0
    %84 = vmatpush1.msra.mxu0 0.0
    %85 = vmatprep.subr.mxu0 0.0
    %86 = vmatpush1.msra.mxu0 0.0
    %87 = vmatprep.subr.mxu0 0.0
    %88 = vmatpush1.msra.mxu0 0.0
    %89 = vmatprep.subr.mxu0 0.0
    %90 = vmatpush1.msra.mxu0 0.0
    %91 = vmatprep.subr.mxu0 0.0
    %92 = vmatpush1.msra.mxu0 0.0
    %93 = vmatprep.subr.mxu0 0.0
    %94 = vmatpush1.msra.mxu0 0.0
    %95 = vmatprep.subr.mxu0 0.0
    %96 = vmatpush1.msra.mxu0 0.0
    %97 = vmatprep.subr.mxu0 0.0
    %98 = vmatpush1.msra.mxu0 0.0
    %99 = vmatprep.subr.mxu0 0.0
    %100 = vmatpush1.msra.mxu0 0.0
    %101 = vmatprep.subr.mxu0 0.0
    %102 = vmatpush1.msra.mxu0 0.0
    %103 = vmatprep.subr.mxu0 0.0
    %104 = vmatpush1.msra.mxu0 0.0
    %105 = vmatprep.subr.mxu0 0.0
    %106 = vmatpush1.msra.mxu0 0.0
    %107 = vmatprep.subr.mxu0 0.0
    %108 = vmatpush1.msra.mxu0 0.0
    %109 = vmatprep.subr.mxu0 0.0
    %110 = vmatpush1.msra.mxu0 0.0
    %111 = vmatprep.subr.mxu0 0.0
    %112 = vmatpush1.msra.mxu0 0.0
    %113 = vmatprep.subr.mxu0 0.0
    %114 = vmatpush1.msra.mxu0 0.0
    %115 = vmatprep.subr.mxu0 0.0
    %116 = vmatpush1.msra.mxu0 0.0
    %117 = vmatprep.subr.mxu0 0.0
    %118 = vmatpush1.msra.mxu0 0.0
    %119 = vmatprep.subr.mxu0 0.0
    %120 = vmatpush1.msra.mxu0 0.0
    %121 = vmatprep.mubr.f32.mxu0 0.0
    %122 = vmatmul.mubr.f32.gmra.mrb[0].mxu0 %v55
    %v123 = vpop.f32.mrb[0].mxu0
    %v124 = vadd.f32 %v51, %v123
    %v125 = vpop.f32.mrb[0].mxu0
    %126 = vdwg.mxu0
    %v127 = vmul.f32 %v124, %v124
    %vm128 = vcmask 523264
    %v129 = vsel %vm128, %v127, 0.0
    %130 = vadd.xlane.f32.xlu0 %v129
    %v131 = vpop.xlane.xlu0 %130
    %v132 = vmax.f32 %v131, 1e-24
    %v133 = vrsqrt.pop %v132
    %v134 = vmul.f32 %v124, %v133
    %135 = vst.msk [vmem:[#allocation7] sm:$0xff] %vm128, %v134
    // Predicated region
    $region22: #{tpu_custom_call.1} parent=1 // pred_check
      _
    $region23: #{tpu_custom_call.1} parent=1 // pred_check_branch
      %137 = sbr.rel (0) target = $region25
    $region24: #{tpu_custom_call.1} parent=1 // pred_region
      %s139 = ssub.s32 128, 128
      %140 = vsyncadd [#allocation4], %s139
      %s142 = sshll.u32 [#allocation7], 4
      %s143 = int_to_ptr.vmem [resolvable:$true] %s142
      %145 = dma.vmem_to_hbm [thread:$0]  %s143, 128, %s3, [#allocation4]
    $region25: #{tpu_custom_call.1} parent=1 // pred_fallthru
      _
    // Predicated region
    $region26: #{tpu_custom_call.1} parent=1 // pred_check
      _
    $region27: #{tpu_custom_call.1} parent=1 // pred_check_branch
      %147 = sbr.rel (0) target = $region29
    $region28: #{tpu_custom_call.1} parent=1 // pred_region
      %148 = dma.done [#allocation4], 128
    $region29: #{tpu_custom_call.1} parent=1 // pred_fallthru
      _
    %149 = vsyncpa [#allocation3], 1
    %150 = vsyncpa [#allocation6], 1
    %151 = vsyncpa [#allocation4], 1

</llo_original>
